<compile_context>
chip_gen: v5e
topology: v5e:2x2
jax: 0.10.0
libtpu: 0.0.40
codegen_flags: <defaults>
</compile_context>

<pallas_src>
import math

import jax
import jax.numpy as jnp
from jax.experimental import pallas as pl
from jax.experimental.pallas import tpu as pltpu

_LANE = 128
_SUBLANE = 8
_INV_SQRT2 = 1.0 / math.sqrt(2.0)


def _round_up(x, m):
    return (x + m - 1) // m * m


def _vmem_capacity_bytes():
    try:
        return int(pltpu.get_tpu_info().vmem_capacity_bytes)
    except Exception:
        return 128 * 1024 * 1024  # v5e/v6e physical VMEM


def _pick_vmem_limit(cap):
    # Leave headroom for compiler scratch (GELU temporaries, dtype casts,
    # spills): ~48 MiB on v7x (64 MiB/TC physical), ~100 MiB on v5e/v6e.
    return int(min(cap - 16 * 1024 * 1024, 100 * 1024 * 1024))


def _spec(shape, index_map, buffers=None):
    """BlockSpec helper; buffers=1 -> single-buffered resident block."""
    if buffers is None:
        return pl.BlockSpec(shape, index_map)
    try:
        return pl.BlockSpec(shape, index_map, pipeline_mode=pl.Buffered(buffers))
    except TypeError:  # older jax without pipeline_mode: default buffering
        return pl.BlockSpec(shape, index_map)


def _mlp_kernel(x_ref, w1_ref, b1_ref, w2_ref, b2_ref, o_ref, acc_ref):
    hj = pl.program_id(1)

    @pl.when(hj == 0)
    def _init():
        acc_ref[...] = jnp.zeros_like(acc_ref)

    # fc1 chunk: (TM, E) @ (E, TH). Cast x to the weight dtype so bf16 weights
    # run bf16 x bf16 on the MXU; accumulate in f32.
    x = x_ref[...].astype(w1_ref.dtype)
    h = jnp.dot(x, w1_ref[...], preferred_element_type=jnp.float32)
    h = h + b1_ref[...].astype(jnp.float32)

    # Exact erf GELU (matches torch.nn.GELU(approximate='none')), kept in f32.
    h = 0.5 * h * (1.0 + jax.lax.erf(h * _INV_SQRT2))

    # dropout p=0.0 -> identity
    # TODO(synk): add stochastic dropout via pltpu.prng_random_bits if a
    # nonzero dropout rate is ever required.

    # fc2 chunk: (TM, TH) @ (TH, E_p), accumulated over H chunks in f32.
    acc_ref[...] += jnp.dot(h.astype(w2_ref.dtype), w2_ref[...],
                            preferred_element_type=jnp.float32)

    @pl.when(hj == pl.num_programs(1) - 1)
    def _finalize():
        o_ref[...] = (acc_ref[...]
                      + b2_ref[...].astype(jnp.float32)).astype(o_ref.dtype)


def prepare_mlp_params(w1, b1, w2, b2, *, tm=None, x_dtype=None, lane=_LANE):
    """One-time parameter preparation (do NOT call per forward pass).

    Pads the hidden dim H and the output dim E to lane multiples, chooses the
    token tile TM and the hidden-dim chunk TH so each grid step's working set
    fits comfortably inside the per-generation VMEM limit.
    """
    E, H = w1.shape
    assert w2.shape == (H, E) and b1.shape == (H,) and b2.shape == (E,)
    if x_dtype is None:
        x_dtype = w1.dtype

    cap = _vmem_capacity_bytes()
    vmem_limit = _pick_vmem_limit(cap)
    two_tc = cap <= 80 * 1024 * 1024          # v7x heuristic: 64 MiB per TC

    if tm is None:
        tm = 256 if two_tc else 512           # bigger tiles on 128 MiB chips

    E_p = _round_up(E, lane)                  # lane-dense output width
    H_p = _round_up(H, lane)

    w_isz = jnp.dtype(w1.dtype).itemsize
    x_isz = jnp.dtype(x_dtype).itemsize

    # Per-step VMEM model: x/out tiles double-buffered + f32 accumulator + b2,
    # plus W1/W2/b1 chunks (single-buffered if fully resident, double if
    # streamed) and the (TM, TH) f32 GELU intermediate + its cast copy.
    budget = int(0.7 * vmem_limit)
    fixed = (2 * tm * E * x_isz + 2 * tm * E_p * x_isz
             + tm * E_p * 4 + E_p * w_isz)

    def bytes_for(th, n_buf):
        weights = n_buf * th * (E + E_p + 1) * w_isz
        interm = tm * th * (4 + w_isz)
        return fixed + weights + interm

    q = H_p // lane
    th = lane
    for d in sorted({d for d in range(1, q + 1) if q % d == 0}, reverse=True):
        cand = d * lane                        # lane-multiple divisor of H_p
        n_buf = 1 if cand == H_p else 2        # resident fast path vs streamed
        if bytes_for(cand, n_buf) <= budget:
            th = cand
            break
    nh = H_p // th

    # Zero padding is exact: GELU(0) = 0, zero W2 rows / b2 entries contribute
    # nothing; padded output columns are sliced off in the wrapper.
    if H_p != H:
        w1 = jnp.pad(w1, ((0, 0), (0, H_p - H)))
        b1 = jnp.pad(b1, ((0, H_p - H),))
        w2 = jnp.pad(w2, ((0, H_p - H), (0, 0)))
    if E_p != E:
        w2 = jnp.pad(w2, ((0, 0), (0, E_p - E)))
        b2 = jnp.pad(b2, ((0, E_p - E),))

    return dict(
        w1=w1, b1=b1.reshape(1, H_p), w2=w2, b2=b2.reshape(1, E_p),
        E=E, H=H, E_p=E_p, H_p=H_p, th=th, nh=nh, tm=tm,
        vmem_limit=vmem_limit, two_tc=two_tc,
    )


def mlp_block(x, params):
    """ViT MLP forward: y = GELU(x @ w1 + b1) @ w2 + b2 (dropout p=0.0)."""
    E, H = params["E"], params["H"]
    E_p, th, nh = params["E_p"], params["th"], params["nh"]
    assert x.shape[-1] == E

    lead = x.shape[:-1]
    M = 1
    for s in lead:
        M *= s
    x2d = x.reshape(M, E)

    tm = min(params["tm"], _round_up(M, _SUBLANE))
    # On 2-TC chips (v7x) make sure the "parallel" M axis has >= 2 tiles.
    if params["two_tc"] and pl.cdiv(M, tm) < 2 and M >= 2 * _SUBLANE:
        tm = _round_up(pl.cdiv(M, 2), _SUBLANE)
    nm = pl.cdiv(M, tm)   # ragged last M tile: masked stores, no jnp.pad of x

    resident = (nh == 1)
    wbuf = 1 if resident else None   # single-buffer constant-index weights

    in_specs = [
        pl.BlockSpec((tm, E), lambda i, j: (i, 0)),            # x tile (pipelined)
        _spec((E, th), lambda i, j: (0, j), buffers=wbuf),     # W1 column chunk
        _spec((1, th), lambda i, j: (0, j), buffers=wbuf),     # b1 chunk
        _spec((th, E_p), lambda i, j: (j, 0), buffers=wbuf),   # W2 row chunk
        _spec((1, E_p), lambda i, j: (0, 0), buffers=1),       # b2 (resident)
    ]
    out_spec = pl.BlockSpec((tm, E_p), lambda i, j: (i, 0))

    # Cost estimate on the logical problem size (scheduling hint for XLA).
    x_isz = jnp.dtype(x.dtype).itemsize
    w_isz = jnp.dtype(params["w1"].dtype).itemsize
    flops = 4 * M * E * H                     # two matmuls, 2*M*E*H each
    transcendentals = M * H                   # erf per hidden activation
    bytes_accessed = int(
        x_isz * 2 * M * E
        + (params["w1"].size + params["w2"].size) * w_isz
        + params["b1"].size * jnp.dtype(params["b1"].dtype).itemsize
        + params["b2"].size * jnp.dtype(params["b2"].dtype).itemsize)

    out2d = pl.pallas_call(
        _mlp_kernel,
        out_shape=jax.ShapeDtypeStruct((M, E_p), x.dtype),
        grid_spec=pltpu.PrefetchScalarGridSpec(
            num_scalar_prefetch=0,
            grid=(nm, nh),
            in_specs=in_specs,
            out_specs=out_spec,
            scratch_shapes=[pltpu.VMEM((tm, E_p), jnp.float32)],
        ),
        compiler_params=pltpu.CompilerParams(
            dimension_semantics=("parallel", "arbitrary"),
            vmem_limit_bytes=params["vmem_limit"],
        ),
        cost_estimate=pl.CostEstimate(
            flops=flops,
            transcendentals=transcendentals,
            bytes_accessed=bytes_accessed,
        ),
    )(x2d, params["w1"], params["b1"], params["w2"], params["b2"])

    return out2d[:, :E].reshape(*lead, E)


def _xavier_uniform(key, fan_in, fan_out, dtype=jnp.float32):
    # matches torch.nn.init.xavier_uniform_: U(-a, a), a = sqrt(6/(fan_in+fan_out))
    a = math.sqrt(6.0 / (fan_in + fan_out))
    return jax.random.uniform(key, (fan_in, fan_out), dtype=dtype, minval=-a, maxval=a)


if __name__ == "__main__":
    # Small ViT-style shapes: batch=2, seq=8, embed_dim=32, mlp_ratio=4 -> hidden=128
    B, S, E = 2, 8, 32
    H = int(E * 4.0)

    key = jax.random.PRNGKey(0)
    kx, kw1, kb1, kw2, kb2 = jax.random.split(key, 5)

    x = jax.random.normal(kx, (B, S, E), dtype=jnp.float32)

    # Parameters (deterministic, mimicking MLPBlock._init_weights).
    # Stored pre-transposed as (in, out).
    w1 = _xavier_uniform(kw1, E, H)                        # fc1.weight.T
    b1 = 1e-6 * jax.random.normal(kb1, (H,), jnp.float32)  # fc1.bias
    w2 = _xavier_uniform(kw2, H, E)                        # fc2.weight.T
    b2 = 1e-6 * jax.random.normal(kb2, (E,), jnp.float32)  # fc2.bias

    params = prepare_mlp_params(w1, b1, w2, b2, x_dtype=x.dtype)

    y = mlp_block(x, params)
    jax.block_until_ready(y)

    # sanity check vs. pure-JAX reference
    h_ref = x.reshape(-1, E) @ w1 + b1
    h_ref = 0.5 * h_ref * (1.0 + jax.lax.erf(h_ref / math.sqrt(2.0)))
    y_ref = (h_ref @ w2 + b2).reshape(B, S, E)
    assert jnp.allclose(y, y_ref, atol=1e-5, rtol=1e-5), "mismatch vs reference"

    print("KERNEL_OK")
</pallas_src>

<mosaic_0001>
module attributes {stable_mosaic.version = 11 : i64} {
  func.func @_mlp_kernel(%arg0: i32, %arg1: i32, %arg2: memref<16x32xf32, #tpu.memory_space<vmem>>, %arg3: memref<32x128xf32, #tpu.memory_space<vmem>>, %arg4: memref<1x128xf32, #tpu.memory_space<vmem>>, %arg5: memref<128x128xf32, #tpu.memory_space<vmem>>, %arg6: memref<1x128xf32, #tpu.memory_space<vmem>>, %arg7: memref<16x128xf32, #tpu.memory_space<vmem>>, %arg8: memref<16x128xf32, #tpu.memory_space<vmem>>) attributes {dimension_semantics = [#tpu.dimension_semantics<parallel>, #tpu.dimension_semantics<arbitrary>], iteration_bounds = array<i64: 1, 1>, scalar_prefetch = 0 : i64, scratch_operands = 1 : i64, tpu.core_type = #tpu.core_type<tc>, window_params = [{transform_indices = @transform_0, window_bounds = array<i64: 16, 32>}, {pipeline_mode = #tpu.pipeline_mode<synchronous>, transform_indices = @transform_1, window_bounds = array<i64: 32, 128>}, {pipeline_mode = #tpu.pipeline_mode<synchronous>, transform_indices = @transform_2, window_bounds = array<i64: 1, 128>}, {pipeline_mode = #tpu.pipeline_mode<synchronous>, transform_indices = @transform_3, window_bounds = array<i64: 128, 128>}, {pipeline_mode = #tpu.pipeline_mode<synchronous>, transform_indices = @transform_4, window_bounds = array<i64: 1, 128>}, {transform_indices = @transform_5, window_bounds = array<i64: 16, 128>}]} {
    %c0_i32 = arith.constant 0 : i32
    %0 = arith.cmpi eq, %arg1, %c0_i32 : i32
    %1 = arith.extui %0 : i1 to i32
    %c0_i32_0 = arith.constant 0 : i32
    %2 = arith.cmpi ne, %1, %c0_i32_0 : i32
    scf.if %2 {
      %cst_18 = arith.constant 0.000000e+00 : f32
      %25 = vector.broadcast %cst_18 : f32 to vector<16x128xf32>
      %c0_19 = arith.constant 0 : index
      %c0_20 = arith.constant 0 : index
      %26 = vector.load %arg8[%c0_19, %c0_20] : memref<16x128xf32, #tpu.memory_space<vmem>>, vector<16x128xf32>
      tpu.vector_store %arg8[%c0_19, %c0_20], %25 {strides = array<i32>} : memref<16x128xf32, #tpu.memory_space<vmem>>, vector<16x128xf32>,
    } else {
    }
    %c0 = arith.constant 0 : index
    %c0_1 = arith.constant 0 : index
    %3 = vector.load %arg2[%c0, %c0_1] : memref<16x32xf32, #tpu.memory_space<vmem>>, vector<16x32xf32>
    %c0_2 = arith.constant 0 : index
    %c0_3 = arith.constant 0 : index
    %4 = vector.load %arg3[%c0_2, %c0_3] : memref<32x128xf32, #tpu.memory_space<vmem>>, vector<32x128xf32>
    %cst = arith.constant dense<0.000000e+00> : vector<16x128xf32>
    %5 = tpu.matmul %3, %4, %cst {dimension_numbers = #tpu.dot_dimension_numbers<[1], [0], [0], [1], [0, 0, 1, 1], [], []>} : vector<16x32xf32>, vector<32x128xf32>, vector<16x128xf32> -> vector<16x128xf32>
    %c0_4 = arith.constant 0 : index
    %c0_5 = arith.constant 0 : index
    %6 = vector.load %arg4[%c0_4, %c0_5] : memref<1x128xf32, #tpu.memory_space<vmem>>, vector<1x128xf32>
    %7 = vector.broadcast %6 : vector<1x128xf32> to vector<16x128xf32>
    %8 = arith.addf %5, %7 : vector<16x128xf32>
    %cst_6 = arith.constant 5.000000e-01 : f32
    %9 = vector.broadcast %cst_6 : f32 to vector<16x128xf32>
    %10 = arith.mulf %9, %8 : vector<16x128xf32>
    %cst_7 = arith.constant 0.707106769 : f32
    %11 = vector.broadcast %cst_7 : f32 to vector<16x128xf32>
    %12 = arith.mulf %8, %11 : vector<16x128xf32>
    %13 = math.erf %12 : vector<16x128xf32>
    %cst_8 = arith.constant 1.000000e+00 : f32
    %14 = vector.broadcast %cst_8 : f32 to vector<16x128xf32>
    %15 = arith.addf %14, %13 : vector<16x128xf32>
    %16 = arith.mulf %10, %15 : vector<16x128xf32>
    %c0_9 = arith.constant 0 : index
    %c0_10 = arith.constant 0 : index
    %17 = vector.load %arg8[%c0_9, %c0_10] : memref<16x128xf32, #tpu.memory_space<vmem>>, vector<16x128xf32>
    %c0_11 = arith.constant 0 : index
    %c0_12 = arith.constant 0 : index
    %18 = vector.load %arg5[%c0_11, %c0_12] : memref<128x128xf32, #tpu.memory_space<vmem>>, vector<128x128xf32>
    %cst_13 = arith.constant dense<0.000000e+00> : vector<16x128xf32>
    %19 = tpu.matmul %16, %18, %cst_13 {dimension_numbers = #tpu.dot_dimension_numbers<[1], [0], [0], [1], [0, 0, 1, 1], [], []>} : vector<16x128xf32>, vector<128x128xf32>, vector<16x128xf32> -> vector<16x128xf32>
    %20 = arith.addf %17, %19 : vector<16x128xf32>
    %c0_14 = arith.constant 0 : index
    %c0_15 = arith.constant 0 : index
    %21 = vector.load %arg8[%c0_14, %c0_15] : memref<16x128xf32, #tpu.memory_space<vmem>>, vector<16x128xf32>
    tpu.vector_store %arg8[%c0_14, %c0_15], %20 {strides = array<i32>} : memref<16x128xf32, #tpu.memory_space<vmem>>, vector<16x128xf32>,
    %c0_i32_16 = arith.constant 0 : i32
    %22 = arith.cmpi eq, %arg1, %c0_i32_16 : i32
    %23 = arith.extui %22 : i1 to i32
    %c0_i32_17 = arith.constant 0 : i32
    %24 = arith.cmpi ne, %23, %c0_i32_17 : i32
    scf.if %24 {
      %c0_18 = arith.constant 0 : index
      %c0_19 = arith.constant 0 : index
      %25 = vector.load %arg8[%c0_18, %c0_19] : memref<16x128xf32, #tpu.memory_space<vmem>>, vector<16x128xf32>
      %c0_20 = arith.constant 0 : index
      %c0_21 = arith.constant 0 : index
      %26 = vector.load %arg6[%c0_20, %c0_21] : memref<1x128xf32, #tpu.memory_space<vmem>>, vector<1x128xf32>
      %27 = vector.broadcast %26 : vector<1x128xf32> to vector<16x128xf32>
      %28 = arith.addf %25, %27 : vector<16x128xf32>
      %c0_22 = arith.constant 0 : index
      %c0_23 = arith.constant 0 : index
      %29 = vector.load %arg7[%c0_22, %c0_23] : memref<16x128xf32, #tpu.memory_space<vmem>>, vector<16x128xf32>
      tpu.vector_store %arg7[%c0_22, %c0_23], %28 {strides = array<i32>} : memref<16x128xf32, #tpu.memory_space<vmem>>, vector<16x128xf32>,
    } else {
    }
    return
  }
  func.func @transform_0(%arg0: i32, %arg1: i32) -> (i32, i32) {
    %c0_i32 = arith.constant 0 : i32
    %c0_i32_0 = arith.constant 0 : i32
    return %arg0, %c0_i32 : i32, i32
  }
  func.func @transform_1(%arg0: i32, %arg1: i32) -> (i32, i32) {
    %c0_i32 = arith.constant 0 : i32
    %c0_i32_0 = arith.constant 0 : i32
    return %c0_i32, %arg1 : i32, i32
  }
  func.func @transform_2(%arg0: i32, %arg1: i32) -> (i32, i32) {
    %c0_i32 = arith.constant 0 : i32
    %c0_i32_0 = arith.constant 0 : i32
    return %c0_i32, %arg1 : i32, i32
  }
  func.func @transform_3(%arg0: i32, %arg1: i32) -> (i32, i32) {
    %c0_i32 = arith.constant 0 : i32
    %c0_i32_0 = arith.constant 0 : i32
    return %arg1, %c0_i32 : i32, i32
  }
  func.func @transform_4(%arg0: i32, %arg1: i32) -> (i32, i32) {
    %c0_i32 = arith.constant 0 : i32
    %c0_i32_0 = arith.constant 0 : i32
    %c0_i32_1 = arith.constant 0 : i32
    return %c0_i32, %c0_i32_0 : i32, i32
  }
  func.func @transform_5(%arg0: i32, %arg1: i32) -> (i32, i32) {
    %c0_i32 = arith.constant 0 : i32
    %c0_i32_0 = arith.constant 0 : i32
    return %arg0, %c0_i32 : i32, i32
  }
}

</mosaic_0001>

<llo_original>
// kernel: tpu_custom_call.1
$region0: #{tpu_custom_call.1}
  #allocation0 [shape = 'u32[]', space=smem, size = 0x4, offset = 0x4, fixed_abs, tag = 'smem constant byte address 0x4 - core index']
  #allocation1 [shape = 'u32[72,128]{1,0:T(1,128)}', space=vmem, size = 0x9000, scoped, tag = 'internal scratch']
  #allocation2 [shape = 'f32[16,128]{1,0:T(8,128)}', space=vmem, size = 0x2000, scoped, tag = 'scratch operand']
  %s0 = inlined_call_operand.hbm [shape: f32[16,32], index: 0, kind: input, shape index: {}]
  %s1 = inlined_call_operand.hbm [shape: f32[32,128], index: 1, kind: input, shape index: {}]
  %s2 = inlined_call_operand.vmem [shape: f32[1,128], index: 2, kind: input, shape index: {}]
  %s3 = inlined_call_operand.hbm [shape: f32[128,128], index: 3, kind: input, shape index: {}]
  %s4 = inlined_call_operand.vmem [shape: f32[1,128], index: 4, kind: input, shape index: {}]
  %s5 = inlined_call_operand.hbm [shape: f32[16,128], index: 5, kind: output, shape index: {}]
  %s6 = sld [smem:[#allocation0]]
  $region50: #{tpu_custom_call.1} parent=0
    _
  %s8 = ssub.s32 1, %s6
  %s9 = scalar_select 0, %s8, %s6
  $region1: #{tpu_custom_call.1} parent=0
    #allocation3 [shape = 'u8[8192]{0}', space=vmem, size = 0x2000, scoped, tag = 'input window, operand 0, single buffered']
    #allocation4 [shape = 's32[1]{0}', space=sflag, size = 0x4, scoped, tag = 'scoped memory for tpu_custom_call.1']
    #allocation5 [shape = 's32[1]{0}', space=sflag, size = 0x4, scoped, tag = 'scoped memory for tpu_custom_call.1']
    #allocation6 [shape = 'u8[16384]{0}', space=vmem, size = 0x4000, scoped, tag = 'input window, operand 1, single buffered']
    #allocation7 [shape = 's32[1]{0}', space=sflag, size = 0x4, scoped, tag = 'scoped memory for tpu_custom_call.1']
    #allocation8 [shape = 'u8[65536]{0}', space=vmem, size = 0x10000, scoped, tag = 'input window, operand 3, single buffered']
    #allocation9 [shape = 'u8[8192]{0}', space=vmem, size = 0x2000, scoped, tag = 'output window, operand 0, single buffered']
    %10 = vsyncpa [#allocation4], 0
    %11 = vsyncpa [#allocation7], 0
    %12 = vsyncpa [#allocation5], 0
    // Predicated region
    $region2: #{tpu_custom_call.1} parent=1 // pred_check
      _
    $region3: #{tpu_custom_call.1} parent=1 // pred_check_branch
      %14 = sbr.rel (0) target = $region5
    $region4: #{tpu_custom_call.1} parent=1 // pred_region
      %16 = vsyncadd [#allocation4], 0
      %s17 = sshll.u32 %s0, 4
      %s18 = int_to_ptr.hbm [resolvable:$true] %s17
      %s19 = sshll.u32 [#allocation3], 4
      %s20 = int_to_ptr.vmem [resolvable:$true] %s19
      %25 = dma.hbm_to_vmem [thread:$0]  %s18, 256, %s20, [#allocation4], 128, 128, 8
    $region5: #{tpu_custom_call.1} parent=1 // pred_fallthru
      _
    // Predicated region
    $region6: #{tpu_custom_call.1} parent=1 // pred_check
      _
    $region7: #{tpu_custom_call.1} parent=1 // pred_check_branch
      %27 = sbr.rel (0) target = $region9
    $region8: #{tpu_custom_call.1} parent=1 // pred_region
      %29 = vsyncadd [#allocation7], 0
      %s30 = sshll.u32 %s1, 4
      %s31 = int_to_ptr.hbm [resolvable:$true] %s30
      %s32 = sshll.u32 [#allocation6], 4
      %s33 = int_to_ptr.vmem [resolvable:$true] %s32
      %38 = dma.hbm_to_vmem [thread:$0]  %s31, 512, %s33, [#allocation7], 128, 128, 8
    $region9: #{tpu_custom_call.1} parent=1 // pred_fallthru
      _
    // Predicated region
    $region10: #{tpu_custom_call.1} parent=1 // pred_check
      _
    $region11: #{tpu_custom_call.1} parent=1 // pred_check_branch
      %40 = sbr.rel (0) target = $region13
    $region12: #{tpu_custom_call.1} parent=1 // pred_region
      _
    $region13: #{tpu_custom_call.1} parent=1 // pred_fallthru
      _
    // Predicated region
    $region14: #{tpu_custom_call.1} parent=1 // pred_check
      _
    $region15: #{tpu_custom_call.1} parent=1 // pred_check_branch
      %42 = sbr.rel (0) target = $region17
    $region16: #{tpu_custom_call.1} parent=1 // pred_region
      %44 = vsyncadd [#allocation7], 0
      %s45 = sshll.u32 %s3, 4
      %s46 = int_to_ptr.hbm [resolvable:$true] %s45
      %s47 = sshll.u32 [#allocation8], 4
      %s48 = int_to_ptr.vmem [resolvable:$true] %s47
      %53 = dma.hbm_to_vmem [thread:$0]  %s46, 2048, %s48, [#allocation7], 128, 128, 8
    $region17: #{tpu_custom_call.1} parent=1 // pred_fallthru
      _
    // Predicated region
    $region18: #{tpu_custom_call.1} parent=1 // pred_check
      _
    $region19: #{tpu_custom_call.1} parent=1 // pred_check_branch
      %55 = sbr.rel (0) target = $region21
    $region20: #{tpu_custom_call.1} parent=1 // pred_region
      _
    $region21: #{tpu_custom_call.1} parent=1 // pred_fallthru
      _
    // Predicated region
    $region22: #{tpu_custom_call.1} parent=1 // pred_check
      _
    $region23: #{tpu_custom_call.1} parent=1 // pred_check_branch
      %57 = sbr.rel (0) target = $region25
    $region24: #{tpu_custom_call.1} parent=1 // pred_region
      %59 = dma.done [#allocation4], 256
    $region25: #{tpu_custom_call.1} parent=1 // pred_fallthru
      _
    // Predicated region
    $region26: #{tpu_custom_call.1} parent=1 // pred_check
      _
    $region27: #{tpu_custom_call.1} parent=1 // pred_check_branch
      %61 = sbr.rel (0) target = $region29
    $region28: #{tpu_custom_call.1} parent=1 // pred_region
      %63 = dma.done [#allocation7], 512
    $region29: #{tpu_custom_call.1} parent=1 // pred_fallthru
      _
    // Predicated region
    $region30: #{tpu_custom_call.1} parent=1 // pred_check
      _
    $region31: #{tpu_custom_call.1} parent=1 // pred_check_branch
      %65 = sbr.rel (0) target = $region33
    $region32: #{tpu_custom_call.1} parent=1 // pred_region
      %67 = dma.done [#allocation7], 2048
    $region33: #{tpu_custom_call.1} parent=1 // pred_fallthru
      _
    %p68 = scmp.eq.s32.totalorder 0, 0
    // Predicated region
    $region34: #{tpu_custom_call.1} parent=1 // pred_check
      %p69 = pneg %p68
    $region35: #{tpu_custom_call.1} parent=1 // pred_check_branch
      %71 = sbr.rel (%p69) target = $region37
    $region36: #{tpu_custom_call.1} parent=1 // pred_region
      %72 = vst [vmem:[#allocation2] sm:$0xff] 0.0
      %73 = vst [vmem:[#allocation2 + $0x8] sm:$0xff] 0.0
    $region37: #{tpu_custom_call.1} parent=1 // pred_fallthru
      _
    %v74 = vld [vmem:[#allocation3] sm:$0xff]
    %v75 = vld [vmem:[#allocation3 + $0x8] sm:$0xff]
    %v76 = vld [vmem:[#allocation6] sm:$0xff]
    %v77 = vld [vmem:[#allocation6 + $0x8] sm:$0xff]
    %v78 = vld [vmem:[#allocation6 + $0x10] sm:$0xff]
    %v79 = vld [vmem:[#allocation6 + $0x18] sm:$0xff]
    %v80 = vld [vmem:[%s2] sm:$0x1]
    %v82 = vperm.slane %v80, 0
    %vm84 = vcmask 261120
    %v86 = vsel %vm84, %v74, 0
    %v89 = vsel %vm84, %v75, 0
    %91 = vmatpush.msra.mxu0 0.0
    %92 = vmatpush.msra.mxu0 0.0
    %93 = vmatpush.msra.mxu0 0.0
    %94 = vmatpush.msra.mxu0 0.0
    %95 = vmatpush.msra.mxu0 0.0
    %96 = vmatpush.msra.mxu0 0.0
    %97 = vmatpush.msra.mxu0 0.0
    %98 = vmatpush.msra.mxu0 0.0
    %99 = vmatpush.msra.mxu0 0.0
    %100 = vmatpush.msra.mxu0 0.0
    %101 = vmatpush.msra.mxu0 0.0
    %102 = vmatpush.msra.mxu0 0.0
    %103 = vmatpush.msra.mxu0 %v79
    %104 = vmatpush.msra.mxu0 %v78
    %105 = vmatpush.msra.mxu0 %v77
    %106 = vmatpush.msra.mxu0 %v76
    %107 = vmatmul.f32.gmra.mxu0 %v86
    %v108 = vpop.f32.mrf.mxu0
    %v109 = vadd.f32 %v82, %v108
    %110 = vmatmul.f32.gmra.mxu0 %v89
    %v111 = vpop.f32.mrf.mxu0
    %v112 = vadd.f32 %v82, %v111
    %113 = vdwg.mxu0
    %v114 = vmul.f32 %v109, 0.5
    %v115 = vmul.f32 %v112, 0.5
    %v116 = vmul.f32 %v109, 0.70710677
    %v117 = vmul.f32 %v112, 0.70710677
    %v118 = vmul.f32 %v116, %v116
    %v119 = vmin.f32 16.0, %v118
    %v120 = vmul.f32 %v119, 2.1237322e-06
    %v121 = vadd.f32 %v120, 0.00028619796
    %v122 = vmul.f32 %v119, %v121
    %v123 = vadd.f32 %v122, 0.0036580483
    %v124 = vmul.f32 %v119, %v123
    %v125 = vadd.f32 %v124, 0.05243302
    %v126 = vmul.f32 %v119, %v125
    %v127 = vadd.f32 %v126, 0.18741608
    %v128 = vmul.f32 %v119, %v127
    %v129 = vadd.f32 %v128, 1.1283791
    %v130 = vmul.f32 %v116, %v129
    %v131 = vmul.f32 %v119, 3.8918573e-05
    %v132 = vadd.f32 %v131, 0.001143296
    %v133 = vmul.f32 %v119, %v132
    %v134 = vadd.f32 %v133, 0.014752088
    %v135 = vmul.f32 %v119, %v134
    %v136 = vadd.f32 %v135, 0.112945676
    %v137 = vmul.f32 %v119, %v136
    %v138 = vadd.f32 %v137, 0.4994258
    %v139 = vmul.f32 %v119, %v138
    %v140 = vadd.f32 %v139, 1.0
    %v141 = vrcp.pop %v140
    %v142 = vmul.f32 %v140, %v141
    %v143 = vsub.f32 1.0, %v142
    %v144 = vmul.f32 %v141, %v143
    %v145 = vadd.f32 %v141, %v144
    %vm146 = vweird.f32 %v140
    %vm147 = vweird.f32 %v141
    %vm148 = vmor %vm146, %vm147
    %v149 = vsel %vm148, %v141, %v145
    %v150 = vand.u32 2147483647, %v140
    %vm151 = vcmp.eq.f32.partialorder %v150, 8.507059e+37
    %v152 = vand.u32 %v140, 2147483648
    %v153 = vor.u32 1.1754944e-38, %v152
    %v154 = vsel %vm151, %v153, %v149
    %v155 = vmul.f32 %v130, %v154
    %v156 = vmin.f32 %v155, 1.0
    %v157 = vmax.f32 %v156, -1.0
    %v158 = vmul.f32 %v117, %v117
    %v159 = vmin.f32 16.0, %v158
    %v160 = vmul.f32 %v159, 2.1237322e-06
    %v161 = vadd.f32 %v160, 0.00028619796
    %v162 = vmul.f32 %v159, %v161
    %v163 = vadd.f32 %v162, 0.0036580483
    %v164 = vmul.f32 %v159, %v163
    %v165 = vadd.f32 %v164, 0.05243302
    %v166 = vmul.f32 %v159, %v165
    %v167 = vadd.f32 %v166, 0.18741608
    %v168 = vmul.f32 %v159, %v167
    %v169 = vadd.f32 %v168, 1.1283791
    %v170 = vmul.f32 %v117, %v169
    %v171 = vmul.f32 %v159, 3.8918573e-05
    %v172 = vadd.f32 %v171, 0.001143296
    %v173 = vmul.f32 %v159, %v172
    %v174 = vadd.f32 %v173, 0.014752088
    %v175 = vmul.f32 %v159, %v174
    %v176 = vadd.f32 %v175, 0.112945676
    %v177 = vmul.f32 %v159, %v176
    %v178 = vadd.f32 %v177, 0.4994258
    %v179 = vmul.f32 %v159, %v178
    %v180 = vadd.f32 %v179, 1.0
    %v181 = vrcp.pop %v180
    %v182 = vmul.f32 %v180, %v181
    %v183 = vsub.f32 1.0, %v182
    %v184 = vmul.f32 %v181, %v183
    %v185 = vadd.f32 %v181, %v184
    %vm186 = vweird.f32 %v180
    %vm187 = vweird.f32 %v181
    %vm188 = vmor %vm186, %vm187
    %v189 = vsel %vm188, %v181, %v185
    %v190 = vand.u32 2147483647, %v180
    %vm191 = vcmp.eq.f32.partialorder %v190, 8.507059e+37
    %v192 = vand.u32 %v180, 2147483648
    %v193 = vor.u32 1.1754944e-38, %v192
    %v194 = vsel %vm191, %v193, %v189
    %v195 = vmul.f32 %v170, %v194
    %v196 = vmin.f32 %v195, 1.0
    %v197 = vmax.f32 %v196, -1.0
    %v198 = vadd.f32 %v157, 1.0
    %v199 = vadd.f32 %v197, 1.0
    %v200 = vmul.f32 %v114, %v198
    %v201 = vmul.f32 %v115, %v199
    %v202 = vld [vmem:[#allocation2] sm:$0xff]
    %v203 = vld [vmem:[#allocation2 + $0x8] sm:$0xff]
    %v204 = vld [vmem:[#allocation8] sm:$0xff]
    %v205 = vld [vmem:[#allocation8 + $0x8] sm:$0xff]
    %v206 = vld [vmem:[#allocation8 + $0x10] sm:$0xff]
    %v207 = vld [vmem:[#allocation8 + $0x18] sm:$0xff]
    %v208 = vld [vmem:[#allocation8 + $0x20] sm:$0xff]
    %v209 = vld [vmem:[#allocation8 + $0x28] sm:$0xff]
    %v210 = vld [vmem:[#allocation8 + $0x30] sm:$0xff]
    %v211 = vld [vmem:[#allocation8 + $0x38] sm:$0xff]
    %v212 = vld [vmem:[#allocation8 + $0x40] sm:$0xff]
    %v213 = vld [vmem:[#allocation8 + $0x48] sm:$0xff]
    %v214 = vld [vmem:[#allocation8 + $0x50] sm:$0xff]
    %v215 = vld [vmem:[#allocation8 + $0x58] sm:$0xff]
    %v216 = vld [vmem:[#allocation8 + $0x60] sm:$0xff]
    %v217 = vld [vmem:[#allocation8 + $0x68] sm:$0xff]
    %v218 = vld [vmem:[#allocation8 + $0x70] sm:$0xff]
    %v219 = vld [vmem:[#allocation8 + $0x78] sm:$0xff]
    %220 = vmatpush.msra.mxu0 %v219
    %221 = vmatpush.msra.mxu0 %v218
    %222 = vmatpush.msra.mxu0 %v217
    %223 = vmatpush.msra.mxu0 %v216
    %224 = vmatpush.msra.mxu0 %v215
    %225 = vmatpush.msra.mxu0 %v214
    %226 = vmatpush.msra.mxu0 %v213
    %227 = vmatpush.msra.mxu0 %v212
    %228 = vmatpush.msra.mxu0 %v211
    %229 = vmatpush.msra.mxu0 %v210
    %230 = vmatpush.msra.mxu0 %v209
    %231 = vmatpush.msra.mxu0 %v208
    %232 = vmatpush.msra.mxu0 %v207
    %233 = vmatpush.msra.mxu0 %v206
    %234 = vmatpush.msra.mxu0 %v205
    %235 = vmatpush.msra.mxu0 %v204
    %236 = vmatmul.f32.gmra.mxu0 %v200
    %v237 = vpop.f32.mrf.mxu0
    %v238 = vadd.f32 0.0, %v237
    %239 = vmatmul.f32.gmra.mxu0 %v201
    %v240 = vpop.f32.mrf.mxu0
    %v241 = vadd.f32 0.0, %v240
    %242 = vdwg.mxu0
    %v243 = vadd.f32 %v202, %v238
    %v244 = vadd.f32 %v203, %v241
    %245 = vst [vmem:[#allocation2] sm:$0xff] %v243
    %246 = vst [vmem:[#allocation2 + $0x8] sm:$0xff] %v244
    // Predicated region
    $region38: #{tpu_custom_call.1} parent=1 // pred_check
      %p247 = pneg %p68
    $region39: #{tpu_custom_call.1} parent=1 // pred_check_branch
      %249 = sbr.rel (%p247) target = $region41
    $region40: #{tpu_custom_call.1} parent=1 // pred_region
      %v250 = vld [vmem:[#allocation2] sm:$0xff]
      %v251 = vld [vmem:[#allocation2 + $0x8] sm:$0xff]
      %v252 = vld [vmem:[%s4] sm:$0x1]
      %v254 = vperm.slane %v252, 0
      %v256 = vadd.f32 %v250, %v254
      %v257 = vadd.f32 %v251, %v254
      %258 = vst [vmem:[#allocation9] sm:$0xff] %v256
      %259 = vst [vmem:[#allocation9 + $0x8] sm:$0xff] %v257
    $region41: #{tpu_custom_call.1} parent=1 // pred_fallthru
      _
    // Predicated region
    $region42: #{tpu_custom_call.1} parent=1 // pred_check
      _
    $region43: #{tpu_custom_call.1} parent=1 // pred_check_branch
      %261 = sbr.rel (0) target = $region45
    $region44: #{tpu_custom_call.1} parent=1 // pred_region
      %263 = vsyncadd [#allocation5], 0
      %s264 = sshll.u32 [#allocation9], 4
      %s265 = int_to_ptr.vmem [resolvable:$true] %s264
      %s266 = sshll.u32 %s5, 4
      %s267 = int_to_ptr.hbm [resolvable:$true] %s266
      %272 = dma.vmem_to_hbm [thread:$0]  %s265, 256, %s267, [#allocation5], 128, 128, 8
    $region45: #{tpu_custom_call.1} parent=1 // pred_fallthru
      _
    // Predicated region
    $region46: #{tpu_custom_call.1} parent=1 // pred_check
      _
    $region47: #{tpu_custom_call.1} parent=1 // pred_check_branch
      %274 = sbr.rel (0) target = $region49
    $region48: #{tpu_custom_call.1} parent=1 // pred_region
      %276 = dma.done [#allocation5], 256
    $region49: #{tpu_custom_call.1} parent=1 // pred_fallthru
      _
    %277 = vsyncpa [#allocation4], 1
    %278 = vsyncpa [#allocation7], 1
    %279 = vsyncpa [#allocation5], 1

</llo_original>
